<compile_context>
chip_gen: v7x
topology: tpu7x:2x2x1
jax: 0.10.0
libtpu: 0.0.40
codegen_flags: <defaults>
</compile_context>

<pallas_src>
import jax
import jax.numpy as jnp
from jax import lax
from jax.experimental import pallas as pl
from jax.experimental.pallas import tpu as pltpu


# ----------------------------------------------------------------------------
# Fused inner-model + CFG-combine kernel (single grid step, whole problem in VMEM)
# ----------------------------------------------------------------------------
def _make_cfg_kernel(B, C, HW, S, D, cond_scale):
    BC = B * C
    scale = float(cond_scale)  # trace-time constant (typical for CFG)

    def kernel(sigma_ref, x_ref, cc_ref, p_ref, o_ref):
        x_all = x_ref[...]                         # (BC, HW) -- one full-slab load
        p = p_ref[...]                             # (BC, D+C+1) packed, batch-tiled params
        wc_t = p[:, :D]                            # (BC, D)  row r -> w_c[r % C]
        wx_t = p[:, D:D + C]                       # (BC, C)  row r -> w_x[r % C]
        bias_col = p[:, D + C:D + C + 1]           # (BC, 1)  row r -> bias[r % C]

        # c_in(sigma) as a (BC, 1) column: one EUP rsqrt for the whole slab.
        row = lax.broadcasted_iota(jnp.int32, (BC, 1), 0)
        sig_col = jnp.full((BC, 1), sigma_ref[0], dtype=jnp.float32)
        for b in range(1, B):
            sig_col = jnp.where(row >= b * C, sigma_ref[b], sig_col)
        c_in_col = lax.rsqrt(sig_col * sig_col + 1.0)

        # Per-batch-group masked c_in columns (zero outside group b).  Together
        # with the batch-tiled W_x these form the columns of the block-diagonal
        # coefficient matrix M[b*C+co, b*C+ci] = c_in_b * w_x[co, ci] without
        # ever materializing M.
        cin_g = [jnp.where((row >= b * C) & (row < (b + 1) * C), c_in_col, 0.0)
                 for b in range(B)]

        # y = M @ x as BC broadcast-FMAs over full 8-sublane vregs (VPU).
        # TODO(synk): for real models with C >= ~64-128, switch this to
        # jnp.dot(..., preferred_element_type=jnp.float32) so the MXU takes over;
        # at C=4 the MXU would pad 4 -> 128/256 and waste >96% of the array.
        def fma_term(r_src):
            b, ci = divmod(r_src, C)
            coef = cin_g[b] * wx_t[:, ci:ci + 1]             # (BC, 1)
            return coef * x_all[r_src:r_src + 1, :]          # (BC, HW) broadcast FMA

        y = fma_term(0)
        for r_src in range(1, BC):
            y = y + fma_term(r_src)

        # Conditioning: both CFG halves' token means in one batched reduce; the
        # CFG combine is folded into the means (exact: the projection is linear),
        # then one lane-reduce projection against the batch-tiled W_c.
        means = jnp.mean(cc_ref[...], axis=1)                              # (2B, D)
        mean_mix = means[:B, :] + (means[B:, :] - means[:B, :]) * scale    # (B, D)
        mean_big = jnp.broadcast_to(mean_mix[0:1, :], (BC, D))
        for b in range(1, B):
            mean_big = jnp.where(row >= b * C, mean_mix[b:b + 1, :], mean_big)
        feat_col = jnp.sum(wc_t * mean_big, axis=1, keepdims=True)         # (BC, 1)

        # Single unmasked, (8,128)-aligned full-tile store (no concat, no temps).
        o_ref[...] = y + feat_col + bias_col

    return kernel


# ----------------------------------------------------------------------------
# CFGDenoiser.forward
# ----------------------------------------------------------------------------
def cfg_denoiser_forward(x, sigma, uncond, cond, cond_scale, params):
    """cond_scale is treated as a trace-time constant (the usual CFG setup);
    a different value triggers a re-trace."""
    w_x, w_c, bias = params
    B, C, H, W = x.shape
    HW = H * W
    S, D = uncond.shape[1], uncond.shape[2]
    BC = B * C

    # BC multiple of 8 and HW multiple of 128 keep the output store an unmasked
    # full-tile vst; other shapes stay correct but pay sublane/lane padding.
    x_flat = x.reshape(BC, HW).astype(jnp.float32)
    sigma = sigma.astype(jnp.float32)
    # One stacked conditioning input: rows 0..B-1 = uncond, rows B..2B-1 = cond.
    cc = jnp.concatenate([uncond, cond], axis=0).astype(jnp.float32)        # (2B, S, D)
    # One packed, batch-tiled parameter slab: [ W_c | W_x | bias ], row r -> r % C.
    packed = jnp.concatenate(
        [jnp.tile(w_c, (B, 1)), jnp.tile(w_x, (B, 1)), jnp.tile(bias, (B, 1))],
        axis=1).astype(jnp.float32)                                          # (BC, D+C+1)

    kernel = _make_cfg_kernel(B, C, HW, S, D, cond_scale)
    out = pl.pallas_call(
        kernel,
        out_shape=jax.ShapeDtypeStruct((BC, HW), jnp.float32),
        grid=(1,),  # single fat step; whole problem sits in VMEM
        # TODO(synk): for real latent sizes (SD/SDXL), tile HW (and/or B) across a
        # grid marked "parallel" so v7x's second TensorCore is used, and keep
        # per-array tiles to a few MiB (v7x VMEM is 64 MiB, 32 MiB default scope).
        in_specs=[
            pl.BlockSpec(memory_space=pltpu.MemorySpace.SMEM),        # sigma (B,)
            pl.BlockSpec((BC, HW), lambda i: (0, 0)),                 # x slab (8, 256)
            pl.BlockSpec((2 * B, S, D), lambda i: (0, 0, 0)),         # uncond|cond
            pl.BlockSpec((BC, D + C + 1), lambda i: (0, 0)),          # packed params
        ],
        out_specs=pl.BlockSpec((BC, HW), lambda i: (0, 0)),
        compiler_params=pltpu.CompilerParams(dimension_semantics=("arbitrary",)),
    )(sigma, x_flat, cc, packed)
    return out.reshape(B, C, H, W)


# ----------------------------------------------------------------------------
# Pure-JAX reference (mirrors the PyTorch forward literally, with the concats)
# ----------------------------------------------------------------------------
def _reference(x, sigma, uncond, cond, cond_scale, params):
    w_x, w_c, bias = params
    x_in = jnp.concatenate([x, x], axis=0)
    sigma_in = jnp.concatenate([sigma, sigma], axis=0)
    cond_in = jnp.concatenate([uncond, cond], axis=0)

    B2, C, H, W = x_in.shape
    x_flat = x_in.reshape(B2, C, H * W)
    c_in = 1.0 / jnp.sqrt(sigma_in ** 2 + 1.0)
    y = jnp.einsum("oc,bcp->bop", w_x, x_flat)
    cond_feat = jnp.einsum("cd,bd->bc", w_c, cond_in.mean(axis=1))
    den = c_in[:, None, None] * y + cond_feat[:, :, None] + bias[None, :, :]
    den = den.reshape(B2, C, H, W)

    B = x.shape[0]
    u, c = den[:B], den[B:]
    return u + (c - u) * cond_scale


if __name__ == "__main__":
    B, C, H, W = 2, 4, 16, 16
    S, D = 8, 32
    cond_scale = 7.5

    key = jax.random.PRNGKey(0)
    kx, ks, ku, kc, kwx, kwc, kb = jax.random.split(key, 7)

    x = jax.random.normal(kx, (B, C, H, W), dtype=jnp.float32)
    sigma = jax.random.uniform(ks, (B,), dtype=jnp.float32, minval=0.5, maxval=5.0)
    uncond = jax.random.normal(ku, (B, S, D), dtype=jnp.float32)
    cond = jax.random.normal(kc, (B, S, D), dtype=jnp.float32)

    # Deterministic synthetic inner-model parameters.
    w_x = jax.random.normal(kwx, (C, C), dtype=jnp.float32) * 0.5
    w_c = jax.random.normal(kwc, (C, D), dtype=jnp.float32) * 0.1
    bias = jax.random.normal(kb, (C, 1), dtype=jnp.float32) * 0.01
    params = (w_x, w_c, bias)

    out = cfg_denoiser_forward(x, sigma, uncond, cond, cond_scale, params)
    out = jax.block_until_ready(out)

    ref = _reference(x, sigma, uncond, cond, cond_scale, params)
    assert out.shape == (B, C, H, W)
    assert jnp.allclose(out, ref, atol=1e-4, rtol=1e-4), "mismatch vs reference"

    print("KERNEL_OK")
</pallas_src>

<mosaic_0001>
module attributes {stable_mosaic.version = 11 : i64} {
  func.func @kernel(%arg0: i32, %arg1: memref<2xf32, #tpu.memory_space<smem>>, %arg2: memref<8x256xf32, #tpu.memory_space<vmem>>, %arg3: memref<4x8x32xf32, #tpu.memory_space<vmem>>, %arg4: memref<8x37xf32, #tpu.memory_space<vmem>>, %arg5: memref<8x256xf32, #tpu.memory_space<vmem>>) attributes {dimension_semantics = [#tpu.dimension_semantics<arbitrary>], iteration_bounds = array<i64: 1>, scalar_prefetch = 0 : i64, scratch_operands = 0 : i64, tpu.core_type = #tpu.core_type<tc>, window_params = [{transform_indices = @transform_0, window_bounds = array<i64: 2>}, {pipeline_mode = #tpu.pipeline_mode<synchronous>, transform_indices = @transform_1, window_bounds = array<i64: 8, 256>}, {pipeline_mode = #tpu.pipeline_mode<synchronous>, transform_indices = @transform_2, window_bounds = array<i64: 4, 8, 32>}, {pipeline_mode = #tpu.pipeline_mode<synchronous>, transform_indices = @transform_3, window_bounds = array<i64: 8, 37>}, {pipeline_mode = #tpu.pipeline_mode<synchronous>, transform_indices = @transform_4, window_bounds = array<i64: 8, 256>}]} {
    %c0 = arith.constant 0 : index
    %c0_0 = arith.constant 0 : index
    %0 = vector.load %arg2[%c0, %c0_0] : memref<8x256xf32, #tpu.memory_space<vmem>>, vector<8x256xf32>
    %c0_1 = arith.constant 0 : index
    %c0_2 = arith.constant 0 : index
    %1 = vector.load %arg4[%c0_1, %c0_2] : memref<8x37xf32, #tpu.memory_space<vmem>>, vector<8x37xf32>
    %2 = vector.extract_strided_slice %1 {offsets = [0, 0], sizes = [8, 32], strides = [1, 1]} : vector<8x37xf32> to vector<8x32xf32>
    %3 = vector.extract_strided_slice %1 {offsets = [0, 32], sizes = [8, 4], strides = [1, 1]} : vector<8x37xf32> to vector<8x4xf32>
    %4 = vector.extract_strided_slice %1 {offsets = [0, 36], sizes = [8, 1], strides = [1, 1]} : vector<8x37xf32> to vector<8x1xf32>
    %5 = tpu.iota {dimensions = array<i32: 0>} : vector<8x1xi32>
    %c0_3 = arith.constant 0 : index
    %6 = memref.load %arg1[%c0_3] : memref<2xf32, #tpu.memory_space<smem>>
    %7 = vector.broadcast %6 : f32 to vector<8x1xf32>
    %c4_i32 = arith.constant 4 : i32
    %8 = vector.broadcast %c4_i32 : i32 to vector<8x1xi32>
    %9 = arith.cmpi sge, %5, %8 : vector<8x1xi32>
    %c1 = arith.constant 1 : index
    %10 = memref.load %arg1[%c1] : memref<2xf32, #tpu.memory_space<smem>>
    %11 = vector.broadcast %10 : f32 to vector<8x1xf32>
    %12 = arith.select %9, %11, %7 : vector<8x1xi1>, vector<8x1xf32>
    %13 = arith.mulf %12, %12 : vector<8x1xf32>
    %cst = arith.constant 1.000000e+00 : f32
    %14 = vector.broadcast %cst : f32 to vector<8x1xf32>
    %15 = arith.addf %13, %14 : vector<8x1xf32>
    %16 = math.rsqrt %15 : vector<8x1xf32>
    %c0_i32 = arith.constant 0 : i32
    %17 = vector.broadcast %c0_i32 : i32 to vector<8x1xi32>
    %18 = arith.cmpi sge, %5, %17 : vector<8x1xi32>
    %c4_i32_4 = arith.constant 4 : i32
    %19 = vector.broadcast %c4_i32_4 : i32 to vector<8x1xi32>
    %20 = arith.cmpi slt, %5, %19 : vector<8x1xi32>
    %21 = arith.andi %18, %20 : vector<8x1xi1>
    %cst_5 = arith.constant 0.000000e+00 : f32
    %22 = vector.broadcast %cst_5 : f32 to vector<8x1xf32>
    %23 = arith.select %21, %16, %22 : vector<8x1xi1>, vector<8x1xf32>
    %c4_i32_6 = arith.constant 4 : i32
    %24 = vector.broadcast %c4_i32_6 : i32 to vector<8x1xi32>
    %25 = arith.cmpi sge, %5, %24 : vector<8x1xi32>
    %c8_i32 = arith.constant 8 : i32
    %26 = vector.broadcast %c8_i32 : i32 to vector<8x1xi32>
    %27 = arith.cmpi slt, %5, %26 : vector<8x1xi32>
    %28 = arith.andi %25, %27 : vector<8x1xi1>
    %cst_7 = arith.constant 0.000000e+00 : f32
    %29 = vector.broadcast %cst_7 : f32 to vector<8x1xf32>
    %30 = arith.select %28, %16, %29 : vector<8x1xi1>, vector<8x1xf32>
    %31 = vector.extract_strided_slice %3 {offsets = [0, 0], sizes = [8, 1], strides = [1, 1]} : vector<8x4xf32> to vector<8x1xf32>
    %32 = arith.mulf %23, %31 : vector<8x1xf32>
    %33 = vector.extract_strided_slice %0 {offsets = [0, 0], sizes = [1, 256], strides = [1, 1]} : vector<8x256xf32> to vector<1x256xf32>
    %34 = vector.broadcast %32 : vector<8x1xf32> to vector<8x256xf32>
    %35 = vector.broadcast %33 : vector<1x256xf32> to vector<8x256xf32>
    %36 = arith.mulf %34, %35 : vector<8x256xf32>
    %37 = vector.extract_strided_slice %3 {offsets = [0, 1], sizes = [8, 1], strides = [1, 1]} : vector<8x4xf32> to vector<8x1xf32>
    %38 = arith.mulf %23, %37 : vector<8x1xf32>
    %39 = vector.extract_strided_slice %0 {offsets = [1, 0], sizes = [1, 256], strides = [1, 1]} : vector<8x256xf32> to vector<1x256xf32>
    %40 = vector.broadcast %38 : vector<8x1xf32> to vector<8x256xf32>
    %41 = vector.broadcast %39 : vector<1x256xf32> to vector<8x256xf32>
    %42 = arith.mulf %40, %41 : vector<8x256xf32>
    %43 = arith.addf %36, %42 : vector<8x256xf32>
    %44 = vector.extract_strided_slice %3 {offsets = [0, 2], sizes = [8, 1], strides = [1, 1]} : vector<8x4xf32> to vector<8x1xf32>
    %45 = arith.mulf %23, %44 : vector<8x1xf32>
    %46 = vector.extract_strided_slice %0 {offsets = [2, 0], sizes = [1, 256], strides = [1, 1]} : vector<8x256xf32> to vector<1x256xf32>
    %47 = vector.broadcast %45 : vector<8x1xf32> to vector<8x256xf32>
    %48 = vector.broadcast %46 : vector<1x256xf32> to vector<8x256xf32>
    %49 = arith.mulf %47, %48 : vector<8x256xf32>
    %50 = arith.addf %43, %49 : vector<8x256xf32>
    %51 = vector.extract_strided_slice %3 {offsets = [0, 3], sizes = [8, 1], strides = [1, 1]} : vector<8x4xf32> to vector<8x1xf32>
    %52 = arith.mulf %23, %51 : vector<8x1xf32>
    %53 = vector.extract_strided_slice %0 {offsets = [3, 0], sizes = [1, 256], strides = [1, 1]} : vector<8x256xf32> to vector<1x256xf32>
    %54 = vector.broadcast %52 : vector<8x1xf32> to vector<8x256xf32>
    %55 = vector.broadcast %53 : vector<1x256xf32> to vector<8x256xf32>
    %56 = arith.mulf %54, %55 : vector<8x256xf32>
    %57 = arith.addf %50, %56 : vector<8x256xf32>
    %58 = vector.extract_strided_slice %3 {offsets = [0, 0], sizes = [8, 1], strides = [1, 1]} : vector<8x4xf32> to vector<8x1xf32>
    %59 = arith.mulf %30, %58 : vector<8x1xf32>
    %60 = vector.extract_strided_slice %0 {offsets = [4, 0], sizes = [1, 256], strides = [1, 1]} : vector<8x256xf32> to vector<1x256xf32>
    %61 = vector.broadcast %59 : vector<8x1xf32> to vector<8x256xf32>
    %62 = vector.broadcast %60 : vector<1x256xf32> to vector<8x256xf32>
    %63 = arith.mulf %61, %62 : vector<8x256xf32>
    %64 = arith.addf %57, %63 : vector<8x256xf32>
    %65 = vector.extract_strided_slice %3 {offsets = [0, 1], sizes = [8, 1], strides = [1, 1]} : vector<8x4xf32> to vector<8x1xf32>
    %66 = arith.mulf %30, %65 : vector<8x1xf32>
    %67 = vector.extract_strided_slice %0 {offsets = [5, 0], sizes = [1, 256], strides = [1, 1]} : vector<8x256xf32> to vector<1x256xf32>
    %68 = vector.broadcast %66 : vector<8x1xf32> to vector<8x256xf32>
    %69 = vector.broadcast %67 : vector<1x256xf32> to vector<8x256xf32>
    %70 = arith.mulf %68, %69 : vector<8x256xf32>
    %71 = arith.addf %64, %70 : vector<8x256xf32>
    %72 = vector.extract_strided_slice %3 {offsets = [0, 2], sizes = [8, 1], strides = [1, 1]} : vector<8x4xf32> to vector<8x1xf32>
    %73 = arith.mulf %30, %72 : vector<8x1xf32>
    %74 = vector.extract_strided_slice %0 {offsets = [6, 0], sizes = [1, 256], strides = [1, 1]} : vector<8x256xf32> to vector<1x256xf32>
    %75 = vector.broadcast %73 : vector<8x1xf32> to vector<8x256xf32>
    %76 = vector.broadcast %74 : vector<1x256xf32> to vector<8x256xf32>
    %77 = arith.mulf %75, %76 : vector<8x256xf32>
    %78 = arith.addf %71, %77 : vector<8x256xf32>
    %79 = vector.extract_strided_slice %3 {offsets = [0, 3], sizes = [8, 1], strides = [1, 1]} : vector<8x4xf32> to vector<8x1xf32>
    %80 = arith.mulf %30, %79 : vector<8x1xf32>
    %81 = vector.extract_strided_slice %0 {offsets = [7, 0], sizes = [1, 256], strides = [1, 1]} : vector<8x256xf32> to vector<1x256xf32>
    %82 = vector.broadcast %80 : vector<8x1xf32> to vector<8x256xf32>
    %83 = vector.broadcast %81 : vector<1x256xf32> to vector<8x256xf32>
    %84 = arith.mulf %82, %83 : vector<8x256xf32>
    %85 = arith.addf %78, %84 : vector<8x256xf32>
    %c0_8 = arith.constant 0 : index
    %c0_9 = arith.constant 0 : index
    %c0_10 = arith.constant 0 : index
    %86 = vector.load %arg3[%c0_8, %c0_9, %c0_10] : memref<4x8x32xf32, #tpu.memory_space<vmem>>, vector<4x8x32xf32>
    %cst_11 = arith.constant dense<0.000000e+00> : vector<4x32xf32>
    %87 = vector.multi_reduction <add>, %86, %cst_11 [1] : vector<4x8x32xf32> to vector<4x32xf32>
    %cst_12 = arith.constant 8.000000e+00 : f32
    %88 = vector.broadcast %cst_12 : f32 to vector<4x32xf32>
    %89 = arith.divf %87, %88 : vector<4x32xf32>
    %90 = vector.extract_strided_slice %89 {offsets = [0, 0], sizes = [2, 32], strides = [1, 1]} : vector<4x32xf32> to vector<2x32xf32>
    %91 = vector.extract_strided_slice %89 {offsets = [2, 0], sizes = [2, 32], strides = [1, 1]} : vector<4x32xf32> to vector<2x32xf32>
    %92 = vector.extract_strided_slice %89 {offsets = [0, 0], sizes = [2, 32], strides = [1, 1]} : vector<4x32xf32> to vector<2x32xf32>
    %93 = arith.subf %91, %92 : vector<2x32xf32>
    %cst_13 = arith.constant 7.500000e+00 : f32
    %94 = vector.broadcast %cst_13 : f32 to vector<2x32xf32>
    %95 = arith.mulf %93, %94 : vector<2x32xf32>
    %96 = arith.addf %90, %95 : vector<2x32xf32>
    %97 = vector.extract_strided_slice %96 {offsets = [0, 0], sizes = [1, 32], strides = [1, 1]} : vector<2x32xf32> to vector<1x32xf32>
    %98 = vector.shape_cast %97 : vector<1x32xf32> to vector<1x32xf32>
    %99 = vector.broadcast %98 : vector<1x32xf32> to vector<8x32xf32>
    %c4_i32_14 = arith.constant 4 : i32
    %100 = vector.broadcast %c4_i32_14 : i32 to vector<8x1xi32>
    %101 = arith.cmpi sge, %5, %100 : vector<8x1xi32>
    %102 = vector.extract_strided_slice %96 {offsets = [1, 0], sizes = [1, 32], strides = [1, 1]} : vector<2x32xf32> to vector<1x32xf32>
    %103 = vector.shape_cast %101 : vector<8x1xi1> to vector<8x1xi1>
    %104 = vector.broadcast %103 : vector<8x1xi1> to vector<8x32xi1>
    %105 = vector.shape_cast %102 : vector<1x32xf32> to vector<1x32xf32>
    %106 = vector.broadcast %105 : vector<1x32xf32> to vector<8x32xf32>
    %107 = arith.select %104, %106, %99 : vector<8x32xi1>, vector<8x32xf32>
    %108 = arith.mulf %2, %107 : vector<8x32xf32>
    %cst_15 = arith.constant dense<0.000000e+00> : vector<8xf32>
    %109 = vector.multi_reduction <add>, %108, %cst_15 [1] : vector<8x32xf32> to vector<8xf32>
    %110 = vector.shape_cast %109 : vector<8xf32> to vector<8x1xf32>
    %111 = vector.broadcast %110 : vector<8x1xf32> to vector<8x256xf32>
    %112 = arith.addf %85, %111 : vector<8x256xf32>
    %113 = vector.broadcast %4 : vector<8x1xf32> to vector<8x256xf32>
    %114 = arith.addf %112, %113 : vector<8x256xf32>
    %c0_16 = arith.constant 0 : index
    %c0_17 = arith.constant 0 : index
    %115 = vector.load %arg5[%c0_16, %c0_17] : memref<8x256xf32, #tpu.memory_space<vmem>>, vector<8x256xf32>
    tpu.vector_store %arg5[%c0_16, %c0_17], %114 {strides = array<i32>} : memref<8x256xf32, #tpu.memory_space<vmem>>, vector<8x256xf32>,
    return
  }
  func.func @transform_0(%arg0: i32) -> i32 {
    %c0_i32 = arith.constant 0 : i32
    %c0_i32_0 = arith.constant 0 : i32
    return %c0_i32 : i32
  }
  func.func @transform_1(%arg0: i32) -> (i32, i32) {
    %c0_i32 = arith.constant 0 : i32
    %c0_i32_0 = arith.constant 0 : i32
    %c0_i32_1 = arith.constant 0 : i32
    return %c0_i32, %c0_i32_0 : i32, i32
  }
  func.func @transform_2(%arg0: i32) -> (i32, i32, i32) {
    %c0_i32 = arith.constant 0 : i32
    %c0_i32_0 = arith.constant 0 : i32
    %c0_i32_1 = arith.constant 0 : i32
    %c0_i32_2 = arith.constant 0 : i32
    return %c0_i32, %c0_i32_0, %c0_i32_1 : i32, i32, i32
  }
  func.func @transform_3(%arg0: i32) -> (i32, i32) {
    %c0_i32 = arith.constant 0 : i32
    %c0_i32_0 = arith.constant 0 : i32
    %c0_i32_1 = arith.constant 0 : i32
    return %c0_i32, %c0_i32_0 : i32, i32
  }
  func.func @transform_4(%arg0: i32) -> (i32, i32) {
    %c0_i32 = arith.constant 0 : i32
    %c0_i32_0 = arith.constant 0 : i32
    %c0_i32_1 = arith.constant 0 : i32
    return %c0_i32, %c0_i32_0 : i32, i32
  }
}

</mosaic_0001>

<llo_original>
// kernel: tpu_custom_call.1
$region0: #{tpu_custom_call.1}
  #allocation0 [shape = 'u32[]', space=smem, size = 0x4, offset = 0x4, fixed_abs, tag = 'smem constant byte address 0x4 - core index']
  #allocation1 [shape = 'u32[144,128]{1,0:T(1,128)}', space=vmem, size = 0x12000, scoped, tag = 'internal scratch']
  %s0 = inlined_call_operand.hbm [shape: f32[2], index: 0, kind: input, shape index: {}]
  %s1 = inlined_call_operand.hbm [shape: f32[8,256], index: 1, kind: input, shape index: {}]
  %s2 = inlined_call_operand.hbm [shape: f32[4,8,32], index: 2, kind: input, shape index: {}]
  %s3 = inlined_call_operand.vmem [shape: f32[8,37], index: 3, kind: input, shape index: {}]
  %s4 = inlined_call_operand.hbm [shape: f32[8,256], index: 4, kind: output, shape index: {}]
  %s5 = sld [smem:[#allocation0]]
  $region38: #{tpu_custom_call.1} parent=0
    _
  %s7 = ssub.s32 1, %s5
  %s8 = scalar_select 0, %s7, %s5
  $region1: #{tpu_custom_call.1} parent=0
    #allocation2 [shape = 'u8[512]{0}', space=smem, size = 0x200, scoped, tag = 'input window, operand 0, single buffered']
    #allocation3 [shape = 's32[1]{0}', space=sflag, size = 0x4, scoped, tag = 'scoped memory for tpu_custom_call.1']
    #allocation4 [shape = 's32[1]{0}', space=sflag, size = 0x4, scoped, tag = 'scoped memory for tpu_custom_call.1']
    #allocation5 [shape = 's32[1]{0}', space=sflag, size = 0x4, scoped, tag = 'scoped memory for tpu_custom_call.1']
    #allocation6 [shape = 'u8[8192]{0}', space=vmem, size = 0x2000, scoped, tag = 'input window, operand 1, single buffered']
    #allocation7 [shape = 'u8[16384]{0}', space=vmem, size = 0x4000, scoped, tag = 'input window, operand 2, single buffered']
    #allocation8 [shape = 's32[1]{0}', space=sflag, size = 0x4, scoped, tag = 'scoped memory for tpu_custom_call.1']
    #allocation9 [shape = 'u8[8192]{0}', space=vmem, size = 0x2000, scoped, tag = 'output window, operand 0, single buffered']
    %9 = vsyncpa [#allocation5], 0
    %10 = vsyncpa [#allocation3], 0
    %11 = vsyncpa [#allocation8], 0
    %12 = vsyncpa [#allocation4], 0
    // Predicated region
    $region2: #{tpu_custom_call.1} parent=1 // pred_check
      _
    $region3: #{tpu_custom_call.1} parent=1 // pred_check_branch
      %14 = sbr.rel (0) target = $region5
    $region4: #{tpu_custom_call.1} parent=1 // pred_region
      %s16 = ssub.s32 16, 16
      %17 = vsyncadd [#allocation5], %s16
      %20 = dma.hbm_to_smem %s0, 16, [#allocation2], [#allocation5]
    $region5: #{tpu_custom_call.1} parent=1 // pred_fallthru
      _
    // Predicated region
    $region6: #{tpu_custom_call.1} parent=1 // pred_check
      _
    $region7: #{tpu_custom_call.1} parent=1 // pred_check_branch
      %22 = sbr.rel (0) target = $region9
    $region8: #{tpu_custom_call.1} parent=1 // pred_region
      %s24 = ssub.s32 256, 256
      %25 = vsyncadd [#allocation3], %s24
      %s27 = sshll.u32 [#allocation6], 4
      %s28 = int_to_ptr.vmem [resolvable:$true] %s27
      %30 = dma.hbm_to_vmem [thread:$0]  %s1, 256, %s28, [#allocation3]
    $region9: #{tpu_custom_call.1} parent=1 // pred_fallthru
      _
    // Predicated region
    $region10: #{tpu_custom_call.1} parent=1 // pred_check
      _
    $region11: #{tpu_custom_call.1} parent=1 // pred_check_branch
      %32 = sbr.rel (0) target = $region13
    $region12: #{tpu_custom_call.1} parent=1 // pred_region
      %s34 = ssub.s32 512, 512
      %35 = vsyncadd [#allocation8], %s34
      %s36 = sshll.u32 [#allocation7], 4
      %s37 = int_to_ptr.vmem [resolvable:$true] %s36
      %42 = dma.hbm_to_vmem [thread:$0]  %s2, 512, %s37, [#allocation8], 128, 128, 8
    $region13: #{tpu_custom_call.1} parent=1 // pred_fallthru
      _
    // Predicated region
    $region14: #{tpu_custom_call.1} parent=1 // pred_check
      _
    $region15: #{tpu_custom_call.1} parent=1 // pred_check_branch
      %44 = sbr.rel (0) target = $region17
    $region16: #{tpu_custom_call.1} parent=1 // pred_region
      _
    $region17: #{tpu_custom_call.1} parent=1 // pred_fallthru
      _
    // Predicated region
    $region18: #{tpu_custom_call.1} parent=1 // pred_check
      _
    $region19: #{tpu_custom_call.1} parent=1 // pred_check_branch
      %46 = sbr.rel (0) target = $region21
    $region20: #{tpu_custom_call.1} parent=1 // pred_region
      %47 = dma.done [#allocation5], 16
    $region21: #{tpu_custom_call.1} parent=1 // pred_fallthru
      _
    // Predicated region
    $region22: #{tpu_custom_call.1} parent=1 // pred_check
      _
    $region23: #{tpu_custom_call.1} parent=1 // pred_check_branch
      %49 = sbr.rel (0) target = $region25
    $region24: #{tpu_custom_call.1} parent=1 // pred_region
      %50 = dma.done [#allocation3], 256
    $region25: #{tpu_custom_call.1} parent=1 // pred_fallthru
      _
    // Predicated region
    $region26: #{tpu_custom_call.1} parent=1 // pred_check
      _
    $region27: #{tpu_custom_call.1} parent=1 // pred_check_branch
      %52 = sbr.rel (0) target = $region29
    $region28: #{tpu_custom_call.1} parent=1 // pred_region
      %53 = dma.done [#allocation8], 512
    $region29: #{tpu_custom_call.1} parent=1 // pred_fallthru
      _
    %54 = sfence
    %v55 = vld [vmem:[#allocation6] sm:$0xff]
    %v56 = vld [vmem:[#allocation6 + $0x8] sm:$0xff]
    %v57 = vld [vmem:[%s3] sm:$0xff]
    %v58 = vlaneseq
    %v59 = vshrl.u32 %v58, 7
    %s60 = sld [smem:[#allocation2]]
    %v61 = vstv %s60
    %vm62 = vcmp.ge.s32.totalorder %v59, 4
    %s63 = sld [smem:[#allocation2 + $0x1]]
    %v64 = vstv %s63
    %v65 = vsel %vm62, %v64, %v61
    %v66 = vmul.f32 %v65, %v65
    %v67 = vadd.f32 %v66, 1.0
    %v68 = vrsqrt.pop %v67
    %vm69 = vcmp.ge.s32.totalorder %v59, 0
    %vm70 = vcmp.lt.s32.totalorder %v59, 4
    %vm71 = vmand %vm69, %vm70
    %v72 = vsel %vm71, %v68, 0.0
    %vm73 = vcmp.lt.s32.totalorder %v59, 8
    %vm74 = vmand %vm62, %vm73
    %v75 = vsel %vm74, %v68, 0.0
    %v76 = vmul.f32 %v72, %v57
    %78 = vset.pattern.permute.xlu0 32
    %79 = vperm.xlu0 %78, %v76
    %v80 = vpop.permute.xlu0 %79
    %v82 = vlaneseq
    %v83 = vshrl.u32 %v82, 7
    %v84 = vsub.s32 0, %v83
    %v85 = vrot.slane %v55, %v84
    %v86 = vlaneseq
    %v87 = vshrl.u32 %v86, 7
    %v88 = vsub.s32 0, %v87
    %v89 = vrot.slane %v56, %v88
    %v90 = vmul.f32 %v80, %v85
    %v91 = vmul.f32 %v80, %v89
    %92 = vset.pattern.permute.xlu0 33
    %93 = vperm.xlu0 %92, %v76
    %v94 = vpop.permute.xlu0 %93
    %v96 = vlaneseq
    %v97 = vshrl.u32 %v96, 7
    %v98 = vsub.s32 1, %v97
    %v99 = vrot.slane %v55, %v98
    %v100 = vlaneseq
    %v101 = vshrl.u32 %v100, 7
    %v102 = vsub.s32 1, %v101
    %v103 = vrot.slane %v56, %v102
    %v104 = vmul.f32 %v94, %v99
    %v105 = vmul.f32 %v94, %v103
    %v106 = vadd.f32 %v90, %v104
    %v107 = vadd.f32 %v91, %v105
    %108 = vset.pattern.permute.xlu0 34
    %109 = vperm.xlu0 %108, %v76
    %v110 = vpop.permute.xlu0 %109
    %v112 = vlaneseq
    %v113 = vshrl.u32 %v112, 7
    %v114 = vsub.s32 2, %v113
    %v115 = vrot.slane %v55, %v114
    %v116 = vlaneseq
    %v117 = vshrl.u32 %v116, 7
    %v118 = vsub.s32 2, %v117
    %v119 = vrot.slane %v56, %v118
    %v120 = vmul.f32 %v110, %v115
    %v121 = vmul.f32 %v110, %v119
    %v122 = vadd.f32 %v106, %v120
    %v123 = vadd.f32 %v107, %v121
    %124 = vset.pattern.permute.xlu0 35
    %125 = vperm.xlu0 %124, %v76
    %v126 = vpop.permute.xlu0 %125
    %v128 = vlaneseq
    %v129 = vshrl.u32 %v128, 7
    %v130 = vsub.s32 3, %v129
    %v131 = vrot.slane %v55, %v130
    %v132 = vlaneseq
    %v133 = vshrl.u32 %v132, 7
    %v134 = vsub.s32 3, %v133
    %v135 = vrot.slane %v56, %v134
    %v136 = vmul.f32 %v126, %v131
    %v137 = vmul.f32 %v126, %v135
    %v138 = vadd.f32 %v122, %v136
    %v139 = vadd.f32 %v123, %v137
    %v140 = vmul.f32 %v75, %v57
    %142 = vset.pattern.permute.xlu0 32
    %143 = vperm.xlu0 %142, %v140
    %v144 = vpop.permute.xlu0 %143
    %v146 = vlaneseq
    %v147 = vshrl.u32 %v146, 7
    %v148 = vsub.s32 4, %v147
    %v149 = vrot.slane %v55, %v148
    %v150 = vlaneseq
    %v151 = vshrl.u32 %v150, 7
    %v152 = vsub.s32 4, %v151
    %v153 = vrot.slane %v56, %v152
    %v154 = vmul.f32 %v144, %v149
    %v155 = vmul.f32 %v144, %v153
    %v156 = vadd.f32 %v138, %v154
    %v157 = vadd.f32 %v139, %v155
    %158 = vset.pattern.permute.xlu0 33
    %159 = vperm.xlu0 %158, %v140
    %v160 = vpop.permute.xlu0 %159
    %v162 = vlaneseq
    %v163 = vshrl.u32 %v162, 7
    %v164 = vsub.s32 5, %v163
    %v165 = vrot.slane %v55, %v164
    %v166 = vlaneseq
    %v167 = vshrl.u32 %v166, 7
    %v168 = vsub.s32 5, %v167
    %v169 = vrot.slane %v56, %v168
    %v170 = vmul.f32 %v160, %v165
    %v171 = vmul.f32 %v160, %v169
    %v172 = vadd.f32 %v156, %v170
    %v173 = vadd.f32 %v157, %v171
    %174 = vset.pattern.permute.xlu0 34
    %175 = vperm.xlu0 %174, %v140
    %v176 = vpop.permute.xlu0 %175
    %v178 = vlaneseq
    %v179 = vshrl.u32 %v178, 7
    %v180 = vsub.s32 6, %v179
    %v181 = vrot.slane %v55, %v180
    %v182 = vlaneseq
    %v183 = vshrl.u32 %v182, 7
    %v184 = vsub.s32 6, %v183
    %v185 = vrot.slane %v56, %v184
    %v186 = vmul.f32 %v176, %v181
    %v187 = vmul.f32 %v176, %v185
    %v188 = vadd.f32 %v172, %v186
    %v189 = vadd.f32 %v173, %v187
    %190 = vset.pattern.permute.xlu0 35
    %191 = vperm.xlu0 %190, %v140
    %v192 = vpop.permute.xlu0 %191
    %v194 = vlaneseq
    %v195 = vshrl.u32 %v194, 7
    %v196 = vsub.s32 7, %v195
    %v197 = vrot.slane %v55, %v196
    %v198 = vlaneseq
    %v199 = vshrl.u32 %v198, 7
    %v200 = vsub.s32 7, %v199
    %v201 = vrot.slane %v56, %v200
    %v202 = vmul.f32 %v192, %v197
    %v203 = vmul.f32 %v192, %v201
    %v204 = vadd.f32 %v188, %v202
    %v205 = vadd.f32 %v189, %v203
    %v206 = vld [vmem:[#allocation7] sm:$0xff]
    %v207 = vld [vmem:[#allocation7 + $0x8] sm:$0xff]
    %v208 = vld [vmem:[#allocation7 + $0x10] sm:$0xff]
    %v209 = vld [vmem:[#allocation7 + $0x18] sm:$0xff]
    %vm210 = vcmask 261120
    %v211 = vsel %vm210, %v206, 0.0
    %v212 = vrot.slane %v211, 4
    %v213 = vadd.f32 %v211, %v212
    %v214 = vrot.slane %v213, 2
    %v215 = vadd.f32 %v213, %v214
    %v216 = vrot.slane %v215, 1
    %v217 = vadd.f32 %v215, %v216
    %v218 = vsel %vm210, %v207, 0.0
    %v219 = vrot.slane %v218, 4
    %v220 = vadd.f32 %v218, %v219
    %v221 = vrot.slane %v220, 2
    %v222 = vadd.f32 %v220, %v221
    %v223 = vrot.slane %v222, 1
    %v224 = vadd.f32 %v222, %v223
    %v225 = vsel %vm210, %v208, 0.0
    %v226 = vrot.slane %v225, 4
    %v227 = vadd.f32 %v225, %v226
    %v228 = vrot.slane %v227, 2
    %v229 = vadd.f32 %v227, %v228
    %v230 = vrot.slane %v229, 1
    %v231 = vadd.f32 %v229, %v230
    %v232 = vsel %vm210, %v209, 0.0
    %v233 = vrot.slane %v232, 4
    %v234 = vadd.f32 %v232, %v233
    %v235 = vrot.slane %v234, 2
    %v236 = vadd.f32 %v234, %v235
    %v237 = vrot.slane %v236, 1
    %v238 = vadd.f32 %v236, %v237
    %v239 = vrcp.pop 8.0
    %v240 = vmul.f32 %v217, %v239
    %v241 = vmul.f32 %v224, %v239
    %v242 = vmul.f32 %v231, %v239
    %v243 = vmul.f32 %v238, %v239
    %v244 = vsub.f32 %v242, %v240
    %v245 = vsub.f32 %v243, %v241
    %v246 = vmul.f32 %v244, 7.5
    %v247 = vmul.f32 %v245, 7.5
    %v248 = vadd.f32 %v240, %v246
    %v249 = vadd.f32 %v241, %v247
    %v250 = vsel %vm62, 1, 0
    %vm251 = vcmp.eq.s32.totalorder %v250, 1
    %v252 = vsel %vm251, %v249, %v248
    %v253 = vmul.f32 %v57, %v252
    %v254 = vsel %vm210, %v253, 0.0
    %255 = vadd.xlane.f32.xlu0 %v254
    %v256 = vpop.xlane.xlu0 %255
    %v257 = vadd.f32 %v204, %v256
    %v258 = vadd.f32 %v205, %v256
    %260 = vset.pattern.permute.xlu0 36
    %261 = vperm.xlu0 %260, %v57
    %v262 = vpop.permute.xlu0 %261
    %v264 = vadd.f32 %v257, %v262
    %v265 = vadd.f32 %v258, %v262
    %266 = vst [vmem:[#allocation9] sm:$0xff] %v264
    %267 = vst [vmem:[#allocation9 + $0x8] sm:$0xff] %v265
    // Predicated region
    $region30: #{tpu_custom_call.1} parent=1 // pred_check
      _
    $region31: #{tpu_custom_call.1} parent=1 // pred_check_branch
      %269 = sbr.rel (0) target = $region33
    $region32: #{tpu_custom_call.1} parent=1 // pred_region
      %s271 = ssub.s32 256, 256
      %272 = vsyncadd [#allocation4], %s271
      %s274 = sshll.u32 [#allocation9], 4
      %s275 = int_to_ptr.vmem [resolvable:$true] %s274
      %277 = dma.vmem_to_hbm [thread:$0]  %s275, 256, %s4, [#allocation4]
    $region33: #{tpu_custom_call.1} parent=1 // pred_fallthru
      _
    // Predicated region
    $region34: #{tpu_custom_call.1} parent=1 // pred_check
      _
    $region35: #{tpu_custom_call.1} parent=1 // pred_check_branch
      %279 = sbr.rel (0) target = $region37
    $region36: #{tpu_custom_call.1} parent=1 // pred_region
      %280 = dma.done [#allocation4], 256
    $region37: #{tpu_custom_call.1} parent=1 // pred_fallthru
      _
    %281 = vsyncpa [#allocation3], 1
    %282 = vsyncpa [#allocation8], 1
    %283 = vsyncpa [#allocation4], 1
    %284 = vsyncpa [#allocation5], 1

</llo_original>
